<compile_context>
chip_gen: v7x
topology: tpu7x:2x2x1
jax: 0.10.0
libtpu: 0.0.40
codegen_flags: <defaults>
</compile_context>

<pallas_src>
import jax
import jax.numpy as jnp
from jax.experimental import pallas as pl
from jax.experimental.pallas import tpu as pltpu


# ---------------------------------------------------------------------------
# PE table (computed once, outside the kernel — mirrors the PyTorch module)
# ---------------------------------------------------------------------------
def _positional_encoding(n_positions: int, d_model: int, out_dtype) -> jax.Array:
    """angle[p, i] = p / 10000 ** (2 * (i // 2) / d_model)
    pe = concat([sin(angle[:, 0::2]), cos(angle[:, 1::2])], axis=-1)

    Computed in float32 for accuracy (per review), cast to out_dtype at the end.
    """
    pos = jnp.arange(n_positions, dtype=jnp.float32)[:, None]
    i = jnp.arange(d_model, dtype=jnp.float32)[None, :]
    angle_rates = 1.0 / jnp.power(
        jnp.asarray(10000.0, jnp.float32), 2.0 * jnp.floor(i / 2.0) / d_model
    )
    angle_rads = pos * angle_rates
    sines = jnp.sin(angle_rads[:, 0::2])
    cosines = jnp.cos(angle_rads[:, 1::2])
    pe = jnp.concatenate([sines, cosines], axis=-1)  # (S, E) float32
    return pe.astype(out_dtype)


# ---------------------------------------------------------------------------
# Kernel: pure streaming add (x tile + VMEM-resident PE tile)
# ---------------------------------------------------------------------------
def _add_pe_kernel(x_ref, pe_ref, o_ref):
    # x_ref/o_ref: (tb, tf); pe_ref: (1, tf) broadcast over the batch rows.
    o_ref[...] = x_ref[...] + pe_ref[...]


# ---------------------------------------------------------------------------
# Tiling heuristics (per-buffer target; double-buffered x + out + pe fits
# comfortably inside the 32 MiB scoped VMEM limit on every generation)
# ---------------------------------------------------------------------------
_TARGET_BLOCK_BYTES = 4 * 1024 * 1024


def _pick_tiles(N: int, F: int, itemsize: int) -> tuple[int, int]:
    # Cap tf so that even an 8-row block stays within the per-buffer target,
    # guaranteeing tb >= 8 (full (8,128) vreg occupancy) whenever N >= 8.
    tf_cap = max(128, _TARGET_BLOCK_BYTES // (8 * itemsize))
    if F <= tf_cap:
        tf = F                                   # full extent: always legal
    else:
        tf = max(128, (tf_cap // 128) * 128)     # multiple of 128 lanes

    rows_budget = max(8, _TARGET_BLOCK_BYTES // (tf * itemsize))
    if N <= rows_budget:
        tb = N                                   # full extent: always legal
    else:
        tb = max(8, (rows_budget // 8) * 8)      # multiple of 8 sublanes

    # v7x megacore: avoid a (1, 1) grid when N is large enough to split into
    # two >=8-row blocks, so both TensorCores get work.
    if pl.cdiv(F, tf) == 1 and pl.cdiv(N, tb) == 1 and N >= 16:
        tb = max(8, (pl.cdiv(N, 2) // 8) * 8)

    return tb, tf


# ---------------------------------------------------------------------------
# Wrapper
# ---------------------------------------------------------------------------
def time_series_positional_encoding(x: jax.Array) -> jax.Array:
    """Adds sinusoidal positional encoding to x of shape (N, S, E).

    Matches TimeSeriesPositionalEncoding(n_positions=S, d_model=E).forward(x).
    """
    N, S, E = x.shape
    F = S * E
    itemsize = jnp.dtype(x.dtype).itemsize

    pe = _positional_encoding(S, E, x.dtype).reshape(1, F)
    x2 = x.reshape(N, F)

    tb, tf = _pick_tiles(N, F, itemsize)

    # Feature axis outer, batch axis innermost: the PE block index (0, f) is
    # constant across consecutive batch iterations -> PE stays VMEM-resident.
    grid = (pl.cdiv(F, tf), pl.cdiv(N, tb))

    out = pl.pallas_call(
        _add_pe_kernel,
        out_shape=jax.ShapeDtypeStruct((N, F), x.dtype),
        grid_spec=pl.GridSpec(
            grid=grid,
            in_specs=[
                pl.BlockSpec((tb, tf), lambda f, b: (b, f)),
                pl.BlockSpec((1, tf), lambda f, b: (0, f)),
            ],
            out_specs=pl.BlockSpec((tb, tf), lambda f, b: (b, f)),
        ),
        # In-place add when the input buffer is donatable (same bandwidth,
        # halves HBM footprint for large activations).
        input_output_aliases={0: 0},
        compiler_params=pltpu.CompilerParams(
            dimension_semantics=("parallel", "parallel"),
            vmem_limit_bytes=32 * 1024 * 1024,
        ),
    )(x2, pe)
    return out.reshape(N, S, E)


# ---------------------------------------------------------------------------
# Pure-JAX reference (mirrors the PyTorch module)
# ---------------------------------------------------------------------------
def _reference(x: jax.Array) -> jax.Array:
    _, S, E = x.shape
    pe = _positional_encoding(S, E, x.dtype)[None]  # (1, S, E)
    return x + pe


if __name__ == "__main__":
    # Module config implied by forward: n_positions == S, d_model == E.
    N, S, E = 2, 8, 32  # batch, seq (n_positions), embed (d_model)
    key = jax.random.PRNGKey(0)
    x = jax.random.normal(key, (N, S, E), dtype=jnp.float32)

    out = jax.block_until_ready(time_series_positional_encoding(x))
    ref = _reference(x)

    assert out.shape == (N, S, E)
    assert out.dtype == x.dtype
    assert jnp.allclose(out, ref, atol=1e-5, rtol=1e-5), (
        f"max abs err = {jnp.max(jnp.abs(out - ref))}"
    )
    print("KERNEL_OK")
</pallas_src>

<mosaic_0001>
module attributes {stable_mosaic.version = 11 : i64} {
  func.func @_add_pe_kernel(%arg0: i32, %arg1: i32, %arg2: memref<2x256xf32, #tpu.memory_space<vmem>>, %arg3: memref<1x256xf32, #tpu.memory_space<vmem>>, %arg4: memref<2x256xf32, #tpu.memory_space<vmem>>) attributes {dimension_semantics = [#tpu.dimension_semantics<parallel>, #tpu.dimension_semantics<parallel>], iteration_bounds = array<i64: 1, 1>, scalar_prefetch = 0 : i64, scratch_operands = 0 : i64, tpu.core_type = #tpu.core_type<tc>, window_params = [{transform_indices = @transform_0, window_bounds = array<i64: 2, 256>}, {transform_indices = @transform_1, window_bounds = array<i64: 1, 256>}, {transform_indices = @transform_2, window_bounds = array<i64: 2, 256>}]} {
    %c0 = arith.constant 0 : index
    %c0_0 = arith.constant 0 : index
    %0 = vector.load %arg2[%c0, %c0_0] : memref<2x256xf32, #tpu.memory_space<vmem>>, vector<2x256xf32>
    %c0_1 = arith.constant 0 : index
    %c0_2 = arith.constant 0 : index
    %1 = vector.load %arg3[%c0_1, %c0_2] : memref<1x256xf32, #tpu.memory_space<vmem>>, vector<1x256xf32>
    %2 = vector.broadcast %1 : vector<1x256xf32> to vector<2x256xf32>
    %3 = arith.addf %0, %2 : vector<2x256xf32>
    %c0_3 = arith.constant 0 : index
    %c0_4 = arith.constant 0 : index
    %4 = vector.load %arg4[%c0_3, %c0_4] : memref<2x256xf32, #tpu.memory_space<vmem>>, vector<2x256xf32>
    tpu.vector_store %arg4[%c0_3, %c0_4], %3 {strides = array<i32>} : memref<2x256xf32, #tpu.memory_space<vmem>>, vector<2x256xf32>,
    return
  }
  func.func @transform_0(%arg0: i32, %arg1: i32) -> (i32, i32) {
    %c0_i32 = arith.constant 0 : i32
    return %arg1, %arg0 : i32, i32
  }
  func.func @transform_1(%arg0: i32, %arg1: i32) -> (i32, i32) {
    %c0_i32 = arith.constant 0 : i32
    %c0_i32_0 = arith.constant 0 : i32
    return %c0_i32, %arg0 : i32, i32
  }
  func.func @transform_2(%arg0: i32, %arg1: i32) -> (i32, i32) {
    %c0_i32 = arith.constant 0 : i32
    return %arg1, %arg0 : i32, i32
  }
}

</mosaic_0001>

<llo_original>
// kernel: tpu_custom_call.1
$region0: #{tpu_custom_call.1}
  #allocation0 [shape = 'u32[]', space=smem, size = 0x4, offset = 0x4, fixed_abs, tag = 'smem constant byte address 0x4 - core index']
  #allocation1 [shape = 'u32[144,128]{1,0:T(1,128)}', space=vmem, size = 0x12000, scoped, tag = 'internal scratch']
  %s0 = inlined_call_operand.hbm [shape: f32[2,256], index: 0, kind: input, shape index: {}, may-alias: {0,2}]
  %s1 = inlined_call_operand.vmem [shape: f32[1,256], index: 1, kind: input, shape index: {}]
  %s2 = inlined_call_operand.hbm [shape: f32[2,256], index: 2, kind: output, shape index: {}, may-alias: {0,2}]
  %s3 = sld [smem:[#allocation0]]
  $region22: #{tpu_custom_call.1} parent=0
    _
  %s5 = ssub.s32 1, %s3
  %s6 = scalar_select 0, %s5, %s3
  $region1: #{tpu_custom_call.1} parent=0
    #allocation2 [shape = 'u8[2048]{0}', space=vmem, size = 0x800, scoped, tag = 'input window, operand 0, single buffered']
    #allocation3 [shape = 's32[1]{0}', space=sflag, size = 0x4, scoped, tag = 'scoped memory for tpu_custom_call.1']
    #allocation4 [shape = 's32[1]{0}', space=sflag, size = 0x4, scoped, tag = 'scoped memory for tpu_custom_call.1']
    #allocation5 [shape = 'u8[2048]{0}', space=vmem, size = 0x800, scoped, tag = 'output window, operand 0, single buffered']
    %7 = vsyncpa [#allocation3], 0
    %8 = vsyncpa [#allocation4], 0
    // Predicated region
    $region2: #{tpu_custom_call.1} parent=1 // pred_check
      _
    $region3: #{tpu_custom_call.1} parent=1 // pred_check_branch
      %10 = sbr.rel (0) target = $region5
    $region4: #{tpu_custom_call.1} parent=1 // pred_region
      %s12 = ssub.s32 64, 64
      %13 = vsyncadd [#allocation3], %s12
      %s15 = sshll.u32 [#allocation2], 4
      %s16 = int_to_ptr.vmem [resolvable:$true] %s15
      %18 = dma.hbm_to_vmem [thread:$0]  %s0, 64, %s16, [#allocation3]
    $region5: #{tpu_custom_call.1} parent=1 // pred_fallthru
      _
    // Predicated region
    $region6: #{tpu_custom_call.1} parent=1 // pred_check
      _
    $region7: #{tpu_custom_call.1} parent=1 // pred_check_branch
      %20 = sbr.rel (0) target = $region9
    $region8: #{tpu_custom_call.1} parent=1 // pred_region
      _
    $region9: #{tpu_custom_call.1} parent=1 // pred_fallthru
      _
    // Predicated region
    $region10: #{tpu_custom_call.1} parent=1 // pred_check
      _
    $region11: #{tpu_custom_call.1} parent=1 // pred_check_branch
      %22 = sbr.rel (0) target = $region13
    $region12: #{tpu_custom_call.1} parent=1 // pred_region
      %23 = dma.done [#allocation3], 64
    $region13: #{tpu_custom_call.1} parent=1 // pred_fallthru
      _
    %v24 = vld [vmem:[#allocation2] sm:$0xf]
    %v25 = vld [vmem:[%s1] sm:$0x3]
    %v27 = vlaneseq
    %v28 = vshrl.u32 %v27, 7
    %v29 = vsub.s32 0, %v28
    %v30 = vrot.slane %v25, %v29
    %v31 = vlaneseq
    %v32 = vshrl.u32 %v31, 7
    %v33 = vsub.s32 1, %v32
    %v34 = vrot.slane %v25, %v33
    %v35 = vcombine.low %v30, %v34
    %v37 = vunpack.c.l.s4 1983009808
    %v38 = vunpack.c.0.s8 %v37
    %v39 = vlaneseq
    %v40 = vshrl.u32 %v39, 7
    %v41 = vsub.s32 %v38, %v40
    %v42 = vrot.slane %v35, %v41
    %v44 = vadd.f32 %v24, %v42
    %45 = vst [vmem:[#allocation5] sm:$0xf] %v44
    // Predicated region
    $region14: #{tpu_custom_call.1} parent=1 // pred_check
      _
    $region15: #{tpu_custom_call.1} parent=1 // pred_check_branch
      %47 = sbr.rel (0) target = $region17
    $region16: #{tpu_custom_call.1} parent=1 // pred_region
      %s49 = ssub.s32 64, 64
      %50 = vsyncadd [#allocation4], %s49
      %s52 = sshll.u32 [#allocation5], 4
      %s53 = int_to_ptr.vmem [resolvable:$true] %s52
      %55 = dma.vmem_to_hbm [thread:$0]  %s53, 64, %s2, [#allocation4]
    $region17: #{tpu_custom_call.1} parent=1 // pred_fallthru
      _
    // Predicated region
    $region18: #{tpu_custom_call.1} parent=1 // pred_check
      _
    $region19: #{tpu_custom_call.1} parent=1 // pred_check_branch
      %57 = sbr.rel (0) target = $region21
    $region20: #{tpu_custom_call.1} parent=1 // pred_region
      %58 = dma.done [#allocation4], 64
    $region21: #{tpu_custom_call.1} parent=1 // pred_fallthru
      _
    %59 = vsyncpa [#allocation3], 1
    %60 = vsyncpa [#allocation4], 1

</llo_original>
